<compile_context>
chip_gen: v6e
topology: v6e:2x2x1
jax: 0.10.0
libtpu: 0.0.40
codegen_flags: <defaults>
</compile_context>

<pallas_src>
import math
import numpy as np
import jax
import jax.numpy as jnp
from jax import lax
from jax.experimental import pallas as pl
from jax.experimental.pallas import tpu as pltpu


def _softplus(x):
    # numerically stable softplus in f32, matches F.softplus semantics
    return jnp.maximum(x, 0.0) + jnp.log1p(jnp.exp(-jnp.abs(x)))


# ------------------------------- Pallas kernels -------------------------------

def fused_mlp_smooth_kernel(x_ref, w1_ref, b1_ref, w2_ref, b2_ref, c_ref, bc_ref,
                            o_ref):
    # h  = softplus(x @ W1 + b1)      (MXU bf16 -> f32 acc, lane-dense K_pad)
    # y  = softplus(h @ W2 + b2)      (MXU)
    # o  = softplus(y @ C  + bc)      (5x5 conv lowered to a 256x256 matmul)
    dd = w1_ref.dtype                              # dot dtype (bf16 or f32)
    x = x_ref[...].astype(dd)
    h = _softplus(
        jnp.dot(x, w1_ref[...], preferred_element_type=jnp.float32)
        + b1_ref[...])
    y = _softplus(
        jnp.dot(h.astype(dd), w2_ref[...], preferred_element_type=jnp.float32)
        + b2_ref[...])
    z = jnp.dot(y.astype(dd), c_ref[...], preferred_element_type=jnp.float32) \
        + bc_ref[...]
    o_ref[...] = _softplus(z)


def mlp_kernel(x_ref, w1_ref, b1_ref, w2_ref, b2_ref, o_ref):
    # smooth_output=False path: two matmuls only
    dd = w1_ref.dtype
    x = x_ref[...].astype(dd)
    h = _softplus(
        jnp.dot(x, w1_ref[...], preferred_element_type=jnp.float32)
        + b1_ref[...])
    o_ref[...] = _softplus(
        jnp.dot(h.astype(dd), w2_ref[...], preferred_element_type=jnp.float32)
        + b2_ref[...])


# --------------------------------- JAX glue -----------------------------------

def init_params(key, L1, L2, K):
    # mirrors initializationhelper: uniform(-0.1, 0.1) for all weights/biases
    c = 0.1
    k1, k2, k3, k4, k5, k6 = jax.random.split(key, 6)
    w1 = jax.random.uniform(k1, (K, L1), jnp.float32, -c, c)   # nn.Linear(L1, K).weight
    b1 = jax.random.uniform(k2, (K,), jnp.float32, -c, c)
    w2 = jax.random.uniform(k3, (L2, K), jnp.float32, -c, c)   # nn.Linear(K, L2).weight
    b2 = jax.random.uniform(k4, (L2,), jnp.float32, -c, c)
    wc = jax.random.uniform(k5, (5, 5), jnp.float32, -c, c)    # nn.Conv2d(1,1,5).weight[0,0]
    bc = jax.random.uniform(k6, (1,), jnp.float32, -c, c)
    return dict(w1=w1, b1=b1, w2=w2, b2=b2, wc=wc, bc=bc)


def _build_conv_matrix(wc, side):
    # C such that (img.reshape(B, side*side) @ C).reshape(B, side, side) equals
    # cross-correlation of img with wc (5x5, stride 1, zero padding 2) — i.e.
    # exactly what nn.Conv2d(1, 1, 5, padding=2) computes (minus the bias).
    rows, cols, widx = [], [], []
    for oi in range(side):
        for oj in range(side):
            for di in range(5):
                for dj in range(5):
                    ii, ij = oi + di - 2, oj + dj - 2
                    if 0 <= ii < side and 0 <= ij < side:
                        rows.append(ii * side + ij)   # input (flat) pixel
                        cols.append(oi * side + oj)   # output (flat) pixel
                        widx.append(di * 5 + dj)      # tap index
    rows = np.asarray(rows, np.int32)
    cols = np.asarray(cols, np.int32)
    widx = np.asarray(widx, np.int32)
    C = jnp.zeros((side * side, side * side), jnp.float32)
    return C.at[rows, cols].set(wc.reshape(-1)[widx])


def prepare_params(params, smooth_output=True, dot_dtype=jnp.bfloat16):
    """One-time weight preparation (hoisted out of the per-call path).

    Transposes to (in, out), zero-pads the hidden dim to a lane-dense multiple
    of 128, builds the Toeplitz conv matrix, and casts all matmul operands to
    `dot_dtype` (biases stay f32 — they are added after the f32-accumulated
    matmul).  Padded W2 rows / b1 entries are EXACTLY zero, which is required
    since softplus(0) = log(2) != 0 in the padded h columns.
    """
    K, L1 = params["w1"].shape
    L2 = params["w2"].shape[0]
    K_pad = ((K + 127) // 128) * 128

    w1_t = jnp.zeros((L1, K_pad), jnp.float32).at[:, :K].set(params["w1"].T)
    b1_r = jnp.zeros((1, K_pad), jnp.float32).at[:, :K].set(params["b1"])
    w2_t = jnp.zeros((K_pad, L2), jnp.float32).at[:K, :].set(params["w2"].T)
    b2_r = params["b2"].reshape(1, L2).astype(jnp.float32)

    prep = dict(
        w1_t=w1_t.astype(dot_dtype),
        b1_r=b1_r,
        w2_t=w2_t.astype(dot_dtype),
        b2_r=b2_r,
    )
    if smooth_output:
        side = int(round(math.sqrt(L2)))
        if side * side != L2:
            raise ValueError(
                f"smooth_output requires L2 to be a perfect square, got {L2}")
        C = _build_conv_matrix(params["wc"], side)                    # (L2, L2)
        prep["c_mat"] = C.astype(dot_dtype)
        prep["bc_r"] = jnp.full((1, L2), params["bc"][0], jnp.float32)
    # materialize now so nothing is recomputed per forward call
    return jax.block_until_ready(prep)


def _pick_batch_tile(B, target=1024, min_steps=8, min_tile=256):
    """Big-but-not-maximal batch tile.

    - Small batches: one tile (rounded up to a multiple of 8).
    - Large batches: tile <= target, but capped so the grid has >= min_steps
      steps (>= ~4 per TensorCore on v7x), and never below min_tile so the
      per-step overhead stays amortized.  The caller pads B up to a multiple
      of the returned tile.
    """
    B8 = ((B + 7) // 8) * 8
    if B8 <= min_tile:
        return B8
    tb = min(target, max(min_tile, B8 // min_steps))
    return max(8, (tb // 8) * 8)


def netG_forward(x, prepared, smooth_output=True, batch_tile=1024):
    B, L1 = x.shape
    K_pad = prepared["w1_t"].shape[1]
    L2 = prepared["w2_t"].shape[1]

    # --- batch-tiled grid; pad B up so every block is full (VMEM stays bounded) ---
    TB = _pick_batch_tile(B, batch_tile)
    n_steps = pl.cdiv(B, TB)
    B_pad = n_steps * TB
    if B_pad != B:
        x = jnp.pad(x, ((0, B_pad - B), (0, 0)))
    grid = (n_steps,)

    x_spec = pl.BlockSpec((TB, L1), lambda i: (i, 0))
    out_spec = pl.BlockSpec((TB, L2), lambda i: (i, 0))

    def w_spec(shape):
        # constant index_map -> weights stay resident in VMEM across grid steps
        return pl.BlockSpec(shape, lambda i: (0, 0))

    compiler_params = pltpu.CompilerParams(
        dimension_semantics=("parallel",),        # megacore sharding on v7x
        vmem_limit_bytes=48 * 1024 * 1024,        # safely under v7x's 64 MiB VMEM
    )

    if smooth_output:
        out = pl.pallas_call(
            fused_mlp_smooth_kernel,
            out_shape=jax.ShapeDtypeStruct((B_pad, L2), jnp.float32),
            grid=grid,
            in_specs=[x_spec,
                      w_spec((L1, K_pad)), w_spec((1, K_pad)),
                      w_spec((K_pad, L2)), w_spec((1, L2)),
                      w_spec((L2, L2)), w_spec((1, L2))],
            out_specs=out_spec,
            compiler_params=compiler_params,
        )(x, prepared["w1_t"], prepared["b1_r"], prepared["w2_t"],
          prepared["b2_r"], prepared["c_mat"], prepared["bc_r"])
    else:
        out = pl.pallas_call(
            mlp_kernel,
            out_shape=jax.ShapeDtypeStruct((B_pad, L2), jnp.float32),
            grid=grid,
            in_specs=[x_spec,
                      w_spec((L1, K_pad)), w_spec((1, K_pad)),
                      w_spec((K_pad, L2)), w_spec((1, L2))],
            out_specs=out_spec,
            compiler_params=compiler_params,
        )(x, prepared["w1_t"], prepared["b1_r"], prepared["w2_t"],
          prepared["b2_r"])

    if B_pad != B:
        out = out[:B]
    return out


def netG_reference(x, params, smooth_output=True, dot_dtype=None):
    # pure-JAX reference. dot_dtype=None -> exact f32; dot_dtype=bf16 emulates
    # the kernel's bf16-operand / f32-accumulation matmuls.
    def dot(a, b):
        if dot_dtype is not None:
            a, b = a.astype(dot_dtype), b.astype(dot_dtype)
        return jnp.dot(a, b, preferred_element_type=jnp.float32)

    h = jax.nn.softplus(dot(x, params["w1"].T) + params["b1"])
    o = jax.nn.softplus(dot(h, params["w2"].T) + params["b2"])
    if smooth_output:
        side = int(round(math.sqrt(o.shape[1])))
        img = o.reshape(-1, 1, side, side)
        w = params["wc"].reshape(1, 1, 5, 5)
        if dot_dtype is not None:
            img, w = img.astype(dot_dtype), w.astype(dot_dtype)
        conv = lax.conv_general_dilated(
            img, w, window_strides=(1, 1), padding=((2, 2), (2, 2)),
            dimension_numbers=("NCHW", "OIHW", "NCHW"),
            preferred_element_type=jnp.float32)
        o = jax.nn.softplus(conv + params["bc"][0]).reshape(-1, o.shape[1])
    return o


if __name__ == "__main__":
    # small shapes consistent with the module: L1 input dim, K hidden, L2 = side**2
    B, L1, K, L2 = 8, 32, 16, 256  # sqrt(L2) = 16

    key = jax.random.PRNGKey(0)
    kx, kp = jax.random.split(key)
    x = jax.random.normal(kx, (B, L1), jnp.float32)
    params = init_params(kp, L1, L2, K)

    # ---- default path: bf16 dot operands, f32 accumulation, fused 3-matmul kernel ----
    prep_bf16 = prepare_params(params, smooth_output=True, dot_dtype=jnp.bfloat16)
    y = jax.block_until_ready(netG_forward(x, prep_bf16, smooth_output=True))
    assert y.shape == (B, L2)
    y_ref_bf16 = netG_reference(x, params, smooth_output=True, dot_dtype=jnp.bfloat16)
    np.testing.assert_allclose(np.asarray(y), np.asarray(y_ref_bf16),
                               rtol=1e-4, atol=1e-4)
    y_ref_f32 = netG_reference(x, params, smooth_output=True)
    np.testing.assert_allclose(np.asarray(y), np.asarray(y_ref_f32),
                               rtol=2e-2, atol=2e-2)   # bf16-operand sanity bound

    # ---- exact f32 path still available and tight vs. the f32 reference ----
    prep_f32 = prepare_params(params, smooth_output=True, dot_dtype=jnp.float32)
    y32 = jax.block_until_ready(netG_forward(x, prep_f32, smooth_output=True))
    np.testing.assert_allclose(np.asarray(y32), np.asarray(y_ref_f32),
                               rtol=2e-4, atol=2e-4)

    # ---- smooth_output=False path (2-matmul kernel) ----
    prep_nosm = prepare_params(params, smooth_output=False, dot_dtype=jnp.bfloat16)
    y2 = jax.block_until_ready(netG_forward(x, prep_nosm, smooth_output=False))
    y2_ref = netG_reference(x, params, smooth_output=False, dot_dtype=jnp.bfloat16)
    np.testing.assert_allclose(np.asarray(y2), np.asarray(y2_ref),
                               rtol=1e-4, atol=1e-4)

    # ---- odd batch size exercises the pad-to-tile + slice path ----
    xb = jax.random.normal(jax.random.PRNGKey(1), (20, L1), jnp.float32)
    yb = jax.block_until_ready(netG_forward(xb, prep_bf16, smooth_output=True))
    yb_ref = netG_reference(xb, params, smooth_output=True, dot_dtype=jnp.bfloat16)
    assert yb.shape == (20, L2)
    np.testing.assert_allclose(np.asarray(yb), np.asarray(yb_ref),
                               rtol=1e-4, atol=1e-4)

    print("KERNEL_OK")
</pallas_src>

<mosaic_0001>
module attributes {stable_mosaic.version = 11 : i64} {
  func.func @fused_mlp_smooth_kernel(%arg0: i32, %arg1: memref<8x32xf32, #tpu.memory_space<vmem>>, %arg2: memref<32x128xbf16, #tpu.memory_space<vmem>>, %arg3: memref<1x128xf32, #tpu.memory_space<vmem>>, %arg4: memref<128x256xbf16, #tpu.memory_space<vmem>>, %arg5: memref<1x256xf32, #tpu.memory_space<vmem>>, %arg6: memref<256x256xbf16, #tpu.memory_space<vmem>>, %arg7: memref<1x256xf32, #tpu.memory_space<vmem>>, %arg8: memref<8x256xf32, #tpu.memory_space<vmem>>) attributes {dimension_semantics = [#tpu.dimension_semantics<parallel>], iteration_bounds = array<i64: 1>, scalar_prefetch = 0 : i64, scratch_operands = 0 : i64, tpu.core_type = #tpu.core_type<tc>, window_params = [{transform_indices = @transform_0, window_bounds = array<i64: 8, 32>}, {pipeline_mode = #tpu.pipeline_mode<synchronous>, transform_indices = @transform_1, window_bounds = array<i64: 32, 128>}, {pipeline_mode = #tpu.pipeline_mode<synchronous>, transform_indices = @transform_2, window_bounds = array<i64: 1, 128>}, {pipeline_mode = #tpu.pipeline_mode<synchronous>, transform_indices = @transform_3, window_bounds = array<i64: 128, 256>}, {pipeline_mode = #tpu.pipeline_mode<synchronous>, transform_indices = @transform_4, window_bounds = array<i64: 1, 256>}, {pipeline_mode = #tpu.pipeline_mode<synchronous>, transform_indices = @transform_5, window_bounds = array<i64: 256, 256>}, {pipeline_mode = #tpu.pipeline_mode<synchronous>, transform_indices = @transform_6, window_bounds = array<i64: 1, 256>}, {transform_indices = @transform_7, window_bounds = array<i64: 8, 256>}]} {
    %c0 = arith.constant 0 : index
    %c0_0 = arith.constant 0 : index
    %0 = vector.load %arg1[%c0, %c0_0] : memref<8x32xf32, #tpu.memory_space<vmem>>, vector<8x32xf32>
    %1 = arith.truncf %0 : vector<8x32xf32> to vector<8x32xbf16>
    %c0_1 = arith.constant 0 : index
    %c0_2 = arith.constant 0 : index
    %2 = vector.load %arg2[%c0_1, %c0_2] : memref<32x128xbf16, #tpu.memory_space<vmem>>, vector<32x128xbf16>
    %cst = arith.constant dense<0.000000e+00> : vector<8x128xf32>
    %3 = tpu.matmul %1, %2, %cst {dimension_numbers = #tpu.dot_dimension_numbers<[1], [0], [0], [1], [0, 0, 1, 1], [], []>} : vector<8x32xbf16>, vector<32x128xbf16>, vector<8x128xf32> -> vector<8x128xf32>
    %c0_3 = arith.constant 0 : index
    %c0_4 = arith.constant 0 : index
    %4 = vector.load %arg3[%c0_3, %c0_4] : memref<1x128xf32, #tpu.memory_space<vmem>>, vector<1x128xf32>
    %5 = vector.broadcast %4 : vector<1x128xf32> to vector<8x128xf32>
    %6 = arith.addf %3, %5 : vector<8x128xf32>
    %cst_5 = arith.constant 0.000000e+00 : f32
    %7 = vector.broadcast %cst_5 : f32 to vector<8x128xf32>
    %8 = arith.maximumf %6, %7 : vector<8x128xf32>
    %9 = math.absf %6 : vector<8x128xf32>
    %cst_6 = arith.constant 0.000000e+00 : f32
    %10 = vector.broadcast %cst_6 : f32 to vector<8x128xf32>
    %11 = arith.subf %10, %9 : vector<8x128xf32>
    %12 = math.exp %11 : vector<8x128xf32>
    %13 = math.log1p %12 : vector<8x128xf32>
    %14 = arith.addf %8, %13 : vector<8x128xf32>
    %15 = arith.truncf %14 : vector<8x128xf32> to vector<8x128xbf16>
    %c0_7 = arith.constant 0 : index
    %c0_8 = arith.constant 0 : index
    %16 = vector.load %arg4[%c0_7, %c0_8] : memref<128x256xbf16, #tpu.memory_space<vmem>>, vector<128x256xbf16>
    %cst_9 = arith.constant dense<0.000000e+00> : vector<8x256xf32>
    %17 = tpu.matmul %15, %16, %cst_9 {dimension_numbers = #tpu.dot_dimension_numbers<[1], [0], [0], [1], [0, 0, 1, 1], [], []>} : vector<8x128xbf16>, vector<128x256xbf16>, vector<8x256xf32> -> vector<8x256xf32>
    %c0_10 = arith.constant 0 : index
    %c0_11 = arith.constant 0 : index
    %18 = vector.load %arg5[%c0_10, %c0_11] : memref<1x256xf32, #tpu.memory_space<vmem>>, vector<1x256xf32>
    %19 = vector.broadcast %18 : vector<1x256xf32> to vector<8x256xf32>
    %20 = arith.addf %17, %19 : vector<8x256xf32>
    %cst_12 = arith.constant 0.000000e+00 : f32
    %21 = vector.broadcast %cst_12 : f32 to vector<8x256xf32>
    %22 = arith.maximumf %20, %21 : vector<8x256xf32>
    %23 = math.absf %20 : vector<8x256xf32>
    %cst_13 = arith.constant 0.000000e+00 : f32
    %24 = vector.broadcast %cst_13 : f32 to vector<8x256xf32>
    %25 = arith.subf %24, %23 : vector<8x256xf32>
    %26 = math.exp %25 : vector<8x256xf32>
    %27 = math.log1p %26 : vector<8x256xf32>
    %28 = arith.addf %22, %27 : vector<8x256xf32>
    %29 = arith.truncf %28 : vector<8x256xf32> to vector<8x256xbf16>
    %c0_14 = arith.constant 0 : index
    %c0_15 = arith.constant 0 : index
    %30 = vector.load %arg6[%c0_14, %c0_15] : memref<256x256xbf16, #tpu.memory_space<vmem>>, vector<256x256xbf16>
    %cst_16 = arith.constant dense<0.000000e+00> : vector<8x256xf32>
    %31 = tpu.matmul %29, %30, %cst_16 {dimension_numbers = #tpu.dot_dimension_numbers<[1], [0], [0], [1], [0, 0, 1, 1], [], []>} : vector<8x256xbf16>, vector<256x256xbf16>, vector<8x256xf32> -> vector<8x256xf32>
    %c0_17 = arith.constant 0 : index
    %c0_18 = arith.constant 0 : index
    %32 = vector.load %arg7[%c0_17, %c0_18] : memref<1x256xf32, #tpu.memory_space<vmem>>, vector<1x256xf32>
    %33 = vector.broadcast %32 : vector<1x256xf32> to vector<8x256xf32>
    %34 = arith.addf %31, %33 : vector<8x256xf32>
    %cst_19 = arith.constant 0.000000e+00 : f32
    %35 = vector.broadcast %cst_19 : f32 to vector<8x256xf32>
    %36 = arith.maximumf %34, %35 : vector<8x256xf32>
    %37 = math.absf %34 : vector<8x256xf32>
    %cst_20 = arith.constant 0.000000e+00 : f32
    %38 = vector.broadcast %cst_20 : f32 to vector<8x256xf32>
    %39 = arith.subf %38, %37 : vector<8x256xf32>
    %40 = math.exp %39 : vector<8x256xf32>
    %41 = math.log1p %40 : vector<8x256xf32>
    %42 = arith.addf %36, %41 : vector<8x256xf32>
    %c0_21 = arith.constant 0 : index
    %c0_22 = arith.constant 0 : index
    %43 = vector.load %arg8[%c0_21, %c0_22] : memref<8x256xf32, #tpu.memory_space<vmem>>, vector<8x256xf32>
    tpu.vector_store %arg8[%c0_21, %c0_22], %42 {strides = array<i32>} : memref<8x256xf32, #tpu.memory_space<vmem>>, vector<8x256xf32>,
    return
  }
  func.func @transform_0(%arg0: i32) -> (i32, i32) {
    %c0_i32 = arith.constant 0 : i32
    %c0_i32_0 = arith.constant 0 : i32
    return %arg0, %c0_i32 : i32, i32
  }
  func.func @transform_1(%arg0: i32) -> (i32, i32) {
    %c0_i32 = arith.constant 0 : i32
    %c0_i32_0 = arith.constant 0 : i32
    %c0_i32_1 = arith.constant 0 : i32
    return %c0_i32, %c0_i32_0 : i32, i32
  }
  func.func @transform_2(%arg0: i32) -> (i32, i32) {
    %c0_i32 = arith.constant 0 : i32
    %c0_i32_0 = arith.constant 0 : i32
    %c0_i32_1 = arith.constant 0 : i32
    return %c0_i32, %c0_i32_0 : i32, i32
  }
  func.func @transform_3(%arg0: i32) -> (i32, i32) {
    %c0_i32 = arith.constant 0 : i32
    %c0_i32_0 = arith.constant 0 : i32
    %c0_i32_1 = arith.constant 0 : i32
    return %c0_i32, %c0_i32_0 : i32, i32
  }
  func.func @transform_4(%arg0: i32) -> (i32, i32) {
    %c0_i32 = arith.constant 0 : i32
    %c0_i32_0 = arith.constant 0 : i32
    %c0_i32_1 = arith.constant 0 : i32
    return %c0_i32, %c0_i32_0 : i32, i32
  }
  func.func @transform_5(%arg0: i32) -> (i32, i32) {
    %c0_i32 = arith.constant 0 : i32
    %c0_i32_0 = arith.constant 0 : i32
    %c0_i32_1 = arith.constant 0 : i32
    return %c0_i32, %c0_i32_0 : i32, i32
  }
  func.func @transform_6(%arg0: i32) -> (i32, i32) {
    %c0_i32 = arith.constant 0 : i32
    %c0_i32_0 = arith.constant 0 : i32
    %c0_i32_1 = arith.constant 0 : i32
    return %c0_i32, %c0_i32_0 : i32, i32
  }
  func.func @transform_7(%arg0: i32) -> (i32, i32) {
    %c0_i32 = arith.constant 0 : i32
    %c0_i32_0 = arith.constant 0 : i32
    return %arg0, %c0_i32 : i32, i32
  }
}

</mosaic_0001>

<llo_original>
// kernel: tpu_custom_call.1
$region0: #{tpu_custom_call.1}
  #allocation0 [shape = 'u32[]', space=smem, size = 0x4, offset = 0x4, fixed_abs, tag = 'smem constant byte address 0x4 - core index']
  #allocation1 [shape = 'u32[144,128]{1,0:T(1,128)}', space=vmem, size = 0x12000, scoped, tag = 'internal scratch']
  %s0 = inlined_call_operand.hbm [shape: f32[8,32], index: 0, kind: input, shape index: {}]
  %s1 = inlined_call_operand.hbm [shape: bf16[32,128], index: 1, kind: input, shape index: {}]
  %s2 = inlined_call_operand.vmem [shape: f32[1,128], index: 2, kind: input, shape index: {}]
  %s3 = inlined_call_operand.hbm [shape: bf16[128,256], index: 3, kind: input, shape index: {}]
  %s4 = inlined_call_operand.vmem [shape: f32[1,256], index: 4, kind: input, shape index: {}]
  %s5 = inlined_call_operand.hbm [shape: bf16[256,256], index: 5, kind: input, shape index: {}]
  %s6 = inlined_call_operand.vmem [shape: f32[1,256], index: 6, kind: input, shape index: {}]
  %s7 = inlined_call_operand.hbm [shape: f32[8,256], index: 7, kind: output, shape index: {}]
  %s8 = sld [smem:[#allocation0]]
  $region54: #{tpu_custom_call.1} parent=0
    _
  %s10 = ssub.s32 1, %s8
  %s11 = scalar_select 0, %s10, %s8
  $region1: #{tpu_custom_call.1} parent=0
    #allocation2 [shape = 'u8[4096]{0}', space=vmem, size = 0x1000, scoped, tag = 'input window, operand 0, single buffered']
    #allocation3 [shape = 's32[1]{0}', space=sflag, size = 0x4, scoped, tag = 'scoped memory for tpu_custom_call.1']
    #allocation4 [shape = 's32[1]{0}', space=sflag, size = 0x4, scoped, tag = 'scoped memory for tpu_custom_call.1']
    #allocation5 [shape = 'u8[8192]{0}', space=vmem, size = 0x2000, scoped, tag = 'input window, operand 1, single buffered']
    #allocation6 [shape = 's32[1]{0}', space=sflag, size = 0x4, scoped, tag = 'scoped memory for tpu_custom_call.1']
    #allocation7 [shape = 'u8[65536]{0}', space=vmem, size = 0x10000, scoped, tag = 'input window, operand 3, single buffered']
    #allocation8 [shape = 'u8[131072]{0}', space=vmem, size = 0x20000, scoped, tag = 'input window, operand 5, single buffered']
    #allocation9 [shape = 's32[1]{0}', space=sflag, size = 0x4, scoped, tag = 'scoped memory for tpu_custom_call.1']
    #allocation10 [shape = 'u8[8192]{0}', space=vmem, size = 0x2000, scoped, tag = 'output window, operand 0, single buffered']
    %12 = vsyncpa [#allocation3], 0
    %13 = vsyncpa [#allocation6], 0
    %14 = vsyncpa [#allocation9], 0
    %15 = vsyncpa [#allocation4], 0
    // Predicated region
    $region2: #{tpu_custom_call.1} parent=1 // pred_check
      _
    $region3: #{tpu_custom_call.1} parent=1 // pred_check_branch
      %17 = sbr.rel (0) target = $region5
    $region4: #{tpu_custom_call.1} parent=1 // pred_region
      %s19 = ssub.s32 128, 128
      %20 = vsyncadd [#allocation3], %s19
      %s22 = sshll.u32 [#allocation2], 4
      %s23 = int_to_ptr.vmem [resolvable:$true] %s22
      %25 = dma.hbm_to_vmem [thread:$0]  %s0, 128, %s23, [#allocation3]
    $region5: #{tpu_custom_call.1} parent=1 // pred_fallthru
      _
    // Predicated region
    $region6: #{tpu_custom_call.1} parent=1 // pred_check
      _
    $region7: #{tpu_custom_call.1} parent=1 // pred_check_branch
      %27 = sbr.rel (0) target = $region9
    $region8: #{tpu_custom_call.1} parent=1 // pred_region
      %s29 = ssub.s32 256, 256
      %30 = vsyncadd [#allocation6], %s29
      %s31 = sshll.u32 [#allocation5], 4
      %s32 = int_to_ptr.vmem [resolvable:$true] %s31
      %37 = dma.hbm_to_vmem [thread:$0]  %s1, 256, %s32, [#allocation6], 64, 64, 4
    $region9: #{tpu_custom_call.1} parent=1 // pred_fallthru
      _
    // Predicated region
    $region10: #{tpu_custom_call.1} parent=1 // pred_check
      _
    $region11: #{tpu_custom_call.1} parent=1 // pred_check_branch
      %39 = sbr.rel (0) target = $region13
    $region12: #{tpu_custom_call.1} parent=1 // pred_region
      _
    $region13: #{tpu_custom_call.1} parent=1 // pred_fallthru
      _
    // Predicated region
    $region14: #{tpu_custom_call.1} parent=1 // pred_check
      _
    $region15: #{tpu_custom_call.1} parent=1 // pred_check_branch
      %41 = sbr.rel (0) target = $region17
    $region16: #{tpu_custom_call.1} parent=1 // pred_region
      %s43 = ssub.s32 2048, 2048
      %44 = vsyncadd [#allocation6], %s43
      %s45 = sshll.u32 [#allocation7], 4
      %s46 = int_to_ptr.vmem [resolvable:$true] %s45
      %51 = dma.hbm_to_vmem [thread:$0]  %s3, 2048, %s46, [#allocation6], 128, 128, 8
    $region17: #{tpu_custom_call.1} parent=1 // pred_fallthru
      _
    // Predicated region
    $region18: #{tpu_custom_call.1} parent=1 // pred_check
      _
    $region19: #{tpu_custom_call.1} parent=1 // pred_check_branch
      %53 = sbr.rel (0) target = $region21
    $region20: #{tpu_custom_call.1} parent=1 // pred_region
      _
    $region21: #{tpu_custom_call.1} parent=1 // pred_fallthru
      _
    // Predicated region
    $region22: #{tpu_custom_call.1} parent=1 // pred_check
      _
    $region23: #{tpu_custom_call.1} parent=1 // pred_check_branch
      %55 = sbr.rel (0) target = $region25
    $region24: #{tpu_custom_call.1} parent=1 // pred_region
      %s57 = ssub.s32 4096, 4096
      %58 = vsyncadd [#allocation9], %s57
      %s59 = sshll.u32 [#allocation8], 4
      %s60 = int_to_ptr.vmem [resolvable:$true] %s59
      %65 = dma.hbm_to_vmem [thread:$0]  %s5, 4096, %s60, [#allocation9], 128, 128, 8
    $region25: #{tpu_custom_call.1} parent=1 // pred_fallthru
      _
    // Predicated region
    $region26: #{tpu_custom_call.1} parent=1 // pred_check
      _
    $region27: #{tpu_custom_call.1} parent=1 // pred_check_branch
      %67 = sbr.rel (0) target = $region29
    $region28: #{tpu_custom_call.1} parent=1 // pred_region
      _
    $region29: #{tpu_custom_call.1} parent=1 // pred_fallthru
      _
    // Predicated region
    $region30: #{tpu_custom_call.1} parent=1 // pred_check
      _
    $region31: #{tpu_custom_call.1} parent=1 // pred_check_branch
      %69 = sbr.rel (0) target = $region33
    $region32: #{tpu_custom_call.1} parent=1 // pred_region
      %70 = dma.done [#allocation3], 128
    $region33: #{tpu_custom_call.1} parent=1 // pred_fallthru
      _
    // Predicated region
    $region34: #{tpu_custom_call.1} parent=1 // pred_check
      _
    $region35: #{tpu_custom_call.1} parent=1 // pred_check_branch
      %72 = sbr.rel (0) target = $region37
    $region36: #{tpu_custom_call.1} parent=1 // pred_region
      %73 = dma.done [#allocation6], 256
    $region37: #{tpu_custom_call.1} parent=1 // pred_fallthru
      _
    // Predicated region
    $region38: #{tpu_custom_call.1} parent=1 // pred_check
      _
    $region39: #{tpu_custom_call.1} parent=1 // pred_check_branch
      %75 = sbr.rel (0) target = $region41
    $region40: #{tpu_custom_call.1} parent=1 // pred_region
      %76 = dma.done [#allocation6], 2048
    $region41: #{tpu_custom_call.1} parent=1 // pred_fallthru
      _
    // Predicated region
    $region42: #{tpu_custom_call.1} parent=1 // pred_check
      _
    $region43: #{tpu_custom_call.1} parent=1 // pred_check_branch
      %78 = sbr.rel (0) target = $region45
    $region44: #{tpu_custom_call.1} parent=1 // pred_region
      %79 = dma.done [#allocation9], 4096
    $region45: #{tpu_custom_call.1} parent=1 // pred_fallthru
      _
    %v81 = vld [vmem:[#allocation2] sm:$0xff]
    %v82 = vpack.c.bf16 %v81, %v81
    %v83 = vld [vmem:[#allocation5] sm:$0xf]
    %v84 = vld [vmem:[#allocation5 + $0x4] sm:$0xf]
    %v85 = vld [vmem:[#allocation5 + $0x8] sm:$0xf]
    %v86 = vld [vmem:[#allocation5 + $0xc] sm:$0xf]
    %v87 = vld [vmem:[%s2] sm:$0x1]
    %v89 = vlaneseq
    %v90 = vshrl.u32 %v89, 7
    %v91 = vsub.s32 0, %v90
    %v92 = vrot.slane %v87, %v91
    %v98 = vunpack.c.l.b16 %v83
    %v99 = vunpack.c.l.b16 %v84
    %v100 = vunpack.c.l.b16 %v85
    %v101 = vunpack.c.l.b16 %v86
    %v102 = vpack.c.b16 %v99, %v98
    %v103 = vpack.c.b16 %v101, %v100
    %vm106 = vcmask 261120
    %v108 = vsel %vm106, %v82, 0
    %110 = vmatprep.subr.bf16.mxu0 0
    %111 = vmatpush1.bf16.msra.mxu0 0
    %112 = vmatprep.subr.bf16.mxu0 0
    %113 = vmatpush1.bf16.msra.mxu0 0
    %114 = vmatprep.subr.bf16.mxu0 0
    %115 = vmatpush1.bf16.msra.mxu0 0
    %116 = vmatprep.subr.bf16.mxu0 0
    %117 = vmatpush1.bf16.msra.mxu0 0
    %118 = vmatprep.subr.bf16.mxu0 0
    %119 = vmatpush1.bf16.msra.mxu0 0
    %120 = vmatprep.subr.bf16.mxu0 0
    %121 = vmatpush1.bf16.msra.mxu0 0
    %122 = vmatprep.subr.bf16.mxu0 0
    %123 = vmatpush1.bf16.msra.mxu0 %v103
    %124 = vmatprep.subr.bf16.mxu0 0
    %125 = vmatpush1.bf16.msra.mxu0 %v102
    %126 = vmatprep.subr.bf16.mxu0 0
    %127 = vmatpush2.bf16.msra.mxu0 0
    %128 = vmatprep.subr.bf16.mxu0 0
    %129 = vmatpush2.bf16.msra.mxu0 0
    %130 = vmatprep.subr.bf16.mxu0 0
    %131 = vmatpush2.bf16.msra.mxu0 0
    %132 = vmatprep.subr.bf16.mxu0 0
    %133 = vmatpush2.bf16.msra.mxu0 0
    %134 = vmatprep.subr.bf16.mxu0 0
    %135 = vmatpush2.bf16.msra.mxu0 0
    %136 = vmatprep.subr.bf16.mxu0 0
    %137 = vmatpush2.bf16.msra.mxu0 0
    %138 = vmatprep.subr.bf16.mxu0 0
    %139 = vmatpush2.bf16.msra.mxu0 0
    %140 = vmatprep.subr.bf16.mxu0 0
    %141 = vmatpush2.bf16.msra.mxu0 0
    %142 = vmatprep.mubr.bf16.mxu0 0
    %143 = vmatmul.mubr.bf16.gmra.mxu0 %v108
    %v144 = vpop.f32.mrf.mxu0
    %v145 = vadd.f32 %v92, %v144
    %v146 = vpop.f32.mrf.mxu0
    %v147 = vpop.f32.mrf.mxu0
    %v148 = vpop.f32.mrf.mxu0
    %149 = vdwg.mxu0
    %v150 = vmax.f32 %v145, 0.0
    %v151 = vand.u32 2147483647, %v145
    %v152 = vsub.f32 0.0, %v151
    %v153 = vmul.f32 %v152, 1.442695
    %v154 = vpow.pop %v153
    %v155 = vadd.f32 %v154, 1.0
    %v156 = vlog2.pop %v155
    %v157 = vmul.f32 %v156, 0.6931472
    %v158 = vmul.f32 -0.5, %v154
    %v159 = vadd.f32 %v158, 1.0
    %v160 = vmul.f32 %v159, %v154
    %v161 = vand.u32 2147483647, %v154
    %vm162 = vcmp.lt.f32.partialorder %v161, 0.0004427343
    %v163 = vsel %vm162, %v160, %v157
    %v164 = vadd.f32 %v150, %v163
    %v165 = vpack.c.bf16 %v164, %v164
    %v166 = vld [vmem:[#allocation7] sm:$0xff]
    %v167 = vld [vmem:[#allocation7 + $0x8] sm:$0xff]
    %v168 = vld [vmem:[#allocation7 + $0x10] sm:$0xff]
    %v169 = vld [vmem:[#allocation7 + $0x18] sm:$0xff]
    %v170 = vld [vmem:[#allocation7 + $0x20] sm:$0xff]
    %v171 = vld [vmem:[#allocation7 + $0x28] sm:$0xff]
    %v172 = vld [vmem:[#allocation7 + $0x30] sm:$0xff]
    %v173 = vld [vmem:[#allocation7 + $0x38] sm:$0xff]
    %v174 = vld [vmem:[#allocation7 + $0x40] sm:$0xff]
    %v175 = vld [vmem:[#allocation7 + $0x48] sm:$0xff]
    %v176 = vld [vmem:[#allocation7 + $0x50] sm:$0xff]
    %v177 = vld [vmem:[#allocation7 + $0x58] sm:$0xff]
    %v178 = vld [vmem:[#allocation7 + $0x60] sm:$0xff]
    %v179 = vld [vmem:[#allocation7 + $0x68] sm:$0xff]
    %v180 = vld [vmem:[#allocation7 + $0x70] sm:$0xff]
    %v181 = vld [vmem:[#allocation7 + $0x78] sm:$0xff]
    %v182 = vld [vmem:[%s4] sm:$0x3]
    %v184 = vlaneseq
    %v185 = vshrl.u32 %v184, 7
    %v186 = vsub.s32 0, %v185
    %v187 = vrot.slane %v182, %v186
    %v188 = vlaneseq
    %v189 = vshrl.u32 %v188, 7
    %v190 = vsub.s32 1, %v189
    %v191 = vrot.slane %v182, %v190
    %v210 = vunpack.c.l.b16 %v166
    %v211 = vunpack.c.h.b16 %v166
    %v212 = vunpack.c.l.b16 %v167
    %v213 = vunpack.c.h.b16 %v167
    %v214 = vunpack.c.l.b16 %v168
    %v215 = vunpack.c.h.b16 %v168
    %v216 = vunpack.c.l.b16 %v169
    %v217 = vunpack.c.h.b16 %v169
    %v218 = vunpack.c.l.b16 %v170
    %v219 = vunpack.c.h.b16 %v170
    %v220 = vunpack.c.l.b16 %v171
    %v221 = vunpack.c.h.b16 %v171
    %v222 = vunpack.c.l.b16 %v172
    %v223 = vunpack.c.h.b16 %v172
    %v224 = vunpack.c.l.b16 %v173
    %v225 = vunpack.c.h.b16 %v173
    %v226 = vunpack.c.l.b16 %v174
    %v227 = vunpack.c.h.b16 %v174
    %v228 = vunpack.c.l.b16 %v175
    %v229 = vunpack.c.h.b16 %v175
    %v230 = vunpack.c.l.b16 %v176
    %v231 = vunpack.c.h.b16 %v176
    %v232 = vunpack.c.l.b16 %v177
    %v233 = vunpack.c.h.b16 %v177
    %v234 = vunpack.c.l.b16 %v178
    %v235 = vunpack.c.h.b16 %v178
    %v236 = vunpack.c.l.b16 %v179
    %v237 = vunpack.c.h.b16 %v179
    %v238 = vunpack.c.l.b16 %v180
    %v239 = vunpack.c.h.b16 %v180
    %v240 = vunpack.c.l.b16 %v181
    %v241 = vunpack.c.h.b16 %v181
    %v242 = vpack.c.b16 %v212, %v210
    %v243 = vpack.c.b16 %v213, %v211
    %v244 = vpack.c.b16 %v216, %v214
    %v245 = vpack.c.b16 %v217, %v215
    %v246 = vpack.c.b16 %v220, %v218
    %v247 = vpack.c.b16 %v221, %v219
    %v248 = vpack.c.b16 %v224, %v222
    %v249 = vpack.c.b16 %v225, %v223
    %v250 = vpack.c.b16 %v228, %v226
    %v251 = vpack.c.b16 %v229, %v227
    %v252 = vpack.c.b16 %v232, %v230
    %v253 = vpack.c.b16 %v233, %v231
    %v254 = vpack.c.b16 %v236, %v234
    %v255 = vpack.c.b16 %v237, %v235
    %v256 = vpack.c.b16 %v240, %v238
    %v257 = vpack.c.b16 %v241, %v239
    %274 = vmatprep.subr.bf16.mxu0 %v257
    %275 = vmatpush1.bf16.msra.mxu0 %v256
    %276 = vmatprep.subr.bf16.mxu0 %v255
    %277 = vmatpush1.bf16.msra.mxu0 %v254
    %278 = vmatprep.subr.bf16.mxu0 %v253
    %279 = vmatpush1.bf16.msra.mxu0 %v252
    %280 = vmatprep.subr.bf16.mxu0 %v251
    %281 = vmatpush1.bf16.msra.mxu0 %v250
    %282 = vmatprep.subr.bf16.mxu0 %v249
    %283 = vmatpush1.bf16.msra.mxu0 %v248
    %284 = vmatprep.subr.bf16.mxu0 %v247
    %285 = vmatpush1.bf16.msra.mxu0 %v246
    %286 = vmatprep.subr.bf16.mxu0 %v245
    %287 = vmatpush1.bf16.msra.mxu0 %v244
    %288 = vmatprep.subr.bf16.mxu0 %v243
    %289 = vmatpush1.bf16.msra.mxu0 %v242
    %290 = vmatprep.subr.bf16.mxu0 0
    %291 = vmatpush2.bf16.msra.mxu0 0
    %292 = vmatprep.subr.bf16.mxu0 0
    %293 = vmatpush2.bf16.msra.mxu0 0
    %294 = vmatprep.subr.bf16.mxu0 0
    %295 = vmatpush2.bf16.msra.mxu0 0
    %296 = vmatprep.subr.bf16.mxu0 0
    %297 = vmatpush2.bf16.msra.mxu0 0
    %298 = vmatprep.subr.bf16.mxu0 0
    %299 = vmatpush2.bf16.msra.mxu0 0
    %300 = vmatprep.subr.bf16.mxu0 0
    %301 = vmatpush2.bf16.msra.mxu0 0
    %302 = vmatprep.subr.bf16.mxu0 0
    %303 = vmatpush2.bf16.msra.mxu0 0
    %304 = vmatprep.subr.bf16.mxu0 0
    %305 = vmatpush2.bf16.msra.mxu0 0
    %306 = vmatprep.mubr.bf16.mxu0 0
    %307 = vmatmul.mubr.bf16.gmra.mxu0 %v165
    %v308 = vpop.f32.mrf.mxu0
    %v309 = vadd.f32 %v187, %v308
    %v310 = vpop.f32.mrf.mxu0
    %v311 = vadd.f32 %v191, %v310
    %v312 = vpop.f32.mrf.mxu0
    %v313 = vpop.f32.mrf.mxu0
    %314 = vdwg.mxu0
    %v315 = vmax.f32 %v309, 0.0
    %v316 = vmax.f32 %v311, 0.0
    %v317 = vand.u32 2147483647, %v309
    %v318 = vand.u32 2147483647, %v311
    %v319 = vsub.f32 0.0, %v317
    %v320 = vsub.f32 0.0, %v318
    %v321 = vmul.f32 %v319, 1.442695
    %v322 = vpow.pop %v321
    %v323 = vmul.f32 %v320, 1.442695
    %v324 = vpow.pop %v323
    %v325 = vadd.f32 %v322, 1.0
    %v326 = vlog2.pop %v325
    %v327 = vmul.f32 %v326, 0.6931472
    %v328 = vmul.f32 -0.5, %v322
    %v329 = vadd.f32 %v328, 1.0
    %v330 = vmul.f32 %v329, %v322
    %v331 = vand.u32 2147483647, %v322
    %vm332 = vcmp.lt.f32.partialorder %v331, 0.0004427343
    %v333 = vsel %vm332, %v330, %v327
    %v334 = vadd.f32 %v324, 1.0
    %v335 = vlog2.pop %v334
    %v336 = vmul.f32 %v335, 0.6931472
    %v337 = vmul.f32 -0.5, %v324
    %v338 = vadd.f32 %v337, 1.0
    %v339 = vmul.f32 %v338, %v324
    %v340 = vand.u32 2147483647, %v324
    %vm341 = vcmp.lt.f32.partialorder %v340, 0.0004427343
    %v342 = vsel %vm341, %v339, %v336
    %v343 = vadd.f32 %v315, %v333
    %v344 = vadd.f32 %v316, %v342
    %v345 = vpack.c.bf16 %v343, %v343
    %v346 = vpack.c.bf16 %v344, %v344
    %v347 = vld [vmem:[#allocation8] sm:$0xff]
    %v348 = vld [vmem:[#allocation8 + $0x8] sm:$0xff]
    %v349 = vld [vmem:[#allocation8 + $0x10] sm:$0xff]
    %v350 = vld [vmem:[#allocation8 + $0x18] sm:$0xff]
    %v351 = vld [vmem:[#allocation8 + $0x20] sm:$0xff]
    %v352 = vld [vmem:[#allocation8 + $0x28] sm:$0xff]
    %v353 = vld [vmem:[#allocation8 + $0x30] sm:$0xff]
    %v354 = vld [vmem:[#allocation8 + $0x38] sm:$0xff]
    %v355 = vld [vmem:[#allocation8 + $0x40] sm:$0xff]
    %v356 = vld [vmem:[#allocation8 + $0x48] sm:$0xff]
    %v357 = vld [vmem:[#allocation8 + $0x50] sm:$0xff]
    %v358 = vld [vmem:[#allocation8 + $0x58] sm:$0xff]
    %v359 = vld [vmem:[#allocation8 + $0x60] sm:$0xff]
    %v360 = vld [vmem:[#allocation8 + $0x68] sm:$0xff]
    %v361 = vld [vmem:[#allocation8 + $0x70] sm:$0xff]
    %v362 = vld [vmem:[#allocation8 + $0x78] sm:$0xff]
    %v363 = vld [vmem:[#allocation8 + $0x80] sm:$0xff]
    %v364 = vld [vmem:[#allocation8 + $0x88] sm:$0xff]
    %v365 = vld [vmem:[#allocation8 + $0x90] sm:$0xff]
    %v366 = vld [vmem:[#allocation8 + $0x98] sm:$0xff]
    %v367 = vld [vmem:[#allocation8 + $0xa0] sm:$0xff]
    %v368 = vld [vmem:[#allocation8 + $0xa8] sm:$0xff]
    %v369 = vld [vmem:[#allocation8 + $0xb0] sm:$0xff]
    %v370 = vld [vmem:[#allocation8 + $0xb8] sm:$0xff]
    %v371 = vld [vmem:[#allocation8 + $0xc0] sm:$0xff]
    %v372 = vld [vmem:[#allocation8 + $0xc8] sm:$0xff]
    %v373 = vld [vmem:[#allocation8 + $0xd0] sm:$0xff]
    %v374 = vld [vmem:[#allocation8 + $0xd8] sm:$0xff]
    %v375 = vld [vmem:[#allocation8 + $0xe0] sm:$0xff]
    %v376 = vld [vmem:[#allocation8 + $0xe8] sm:$0xff]
    %v377 = vld [vmem:[#allocation8 + $0xf0] sm:$0xff]
    %v378 = vld [vmem:[#allocation8 + $0xf8] sm:$0xff]
    %v379 = vld [vmem:[%s6] sm:$0x3]
    %v381 = vlaneseq
    %v382 = vshrl.u32 %v381, 7
    %v383 = vsub.s32 0, %v382
    %v384 = vrot.slane %v379, %v383
    %v385 = vlaneseq
    %v386 = vshrl.u32 %v385, 7
    %v387 = vsub.s32 1, %v386
    %v388 = vrot.slane %v379, %v387
    %v423 = vunpack.c.l.b16 %v347
    %v424 = vunpack.c.h.b16 %v347
    %v425 = vunpack.c.l.b16 %v348
    %v426 = vunpack.c.h.b16 %v348
    %v427 = vunpack.c.l.b16 %v349
    %v428 = vunpack.c.h.b16 %v349
    %v429 = vunpack.c.l.b16 %v350
    %v430 = vunpack.c.h.b16 %v350
    %v431 = vunpack.c.l.b16 %v351
    %v432 = vunpack.c.h.b16 %v351
    %v433 = vunpack.c.l.b16 %v352
    %v434 = vunpack.c.h.b16 %v352
    %v435 = vunpack.c.l.b16 %v353
    %v436 = vunpack.c.h.b16 %v353
    %v437 = vunpack.c.l.b16 %v354
    %v438 = vunpack.c.h.b16 %v354
    %v439 = vunpack.c.l.b16 %v355
    %v440 = vunpack.c.h.b16 %v355
    %v441 = vunpack.c.l.b16 %v356
    %v442 = vunpack.c.h.b16 %v356
    %v443 = vunpack.c.l.b16 %v357
    %v444 = vunpack.c.h.b16 %v357
    %v445 = vunpack.c.l.b16 %v358
    %v446 = vunpack.c.h.b16 %v358
    %v447 = vunpack.c.l.b16 %v359
    %v448 = vunpack.c.h.b16 %v359
    %v449 = vunpack.c.l.b16 %v360
    %v450 = vunpack.c.h.b16 %v360
    %v451 = vunpack.c.l.b16 %v361
    %v452 = vunpack.c.h.b16 %v361
    %v453 = vunpack.c.l.b16 %v362
    %v454 = vunpack.c.h.b16 %v362
    %v455 = vunpack.c.l.b16 %v363
    %v456 = vunpack.c.h.b16 %v363
    %v457 = vunpack.c.l.b16 %v364
    %v458 = vunpack.c.h.b16 %v364
    %v459 = vunpack.c.l.b16 %v365
    %v460 = vunpack.c.h.b16 %v365
    %v461 = vunpack.c.l.b16 %v366
    %v462 = vunpack.c.h.b16 %v366
    %v463 = vunpack.c.l.b16 %v367
    %v464 = vunpack.c.h.b16 %v367
    %v465 = vunpack.c.l.b16 %v368
    %v466 = vunpack.c.h.b16 %v368
    %v467 = vunpack.c.l.b16 %v369
    %v468 = vunpack.c.h.b16 %v369
    %v469 = vunpack.c.l.b16 %v370
    %v470 = vunpack.c.h.b16 %v370
    %v471 = vunpack.c.l.b16 %v371
    %v472 = vunpack.c.h.b16 %v371
    %v473 = vunpack.c.l.b16 %v372
    %v474 = vunpack.c.h.b16 %v372
    %v475 = vunpack.c.l.b16 %v373
    %v476 = vunpack.c.h.b16 %v373
    %v477 = vunpack.c.l.b16 %v374
    %v478 = vunpack.c.h.b16 %v374
    %v479 = vunpack.c.l.b16 %v375
    %v480 = vunpack.c.h.b16 %v375
    %v481 = vunpack.c.l.b16 %v376
    %v482 = vunpack.c.h.b16 %v376
    %v483 = vunpack.c.l.b16 %v377
    %v484 = vunpack.c.h.b16 %v377
    %v485 = vunpack.c.l.b16 %v378
    %v486 = vunpack.c.h.b16 %v378
    %v487 = vpack.c.b16 %v425, %v423
    %v488 = vpack.c.b16 %v426, %v424
    %v489 = vpack.c.b16 %v429, %v427
    %v490 = vpack.c.b16 %v430, %v428
    %v491 = vpack.c.b16 %v433, %v431
    %v492 = vpack.c.b16 %v434, %v432
    %v493 = vpack.c.b16 %v437, %v435
    %v494 = vpack.c.b16 %v438, %v436
    %v495 = vpack.c.b16 %v441, %v439
    %v496 = vpack.c.b16 %v442, %v440
    %v497 = vpack.c.b16 %v445, %v443
    %v498 = vpack.c.b16 %v446, %v444
    %v499 = vpack.c.b16 %v449, %v447
    %v500 = vpack.c.b16 %v450, %v448
    %v501 = vpack.c.b16 %v453, %v451
    %v502 = vpack.c.b16 %v454, %v452
    %v503 = vpack.c.b16 %v457, %v455
    %v504 = vpack.c.b16 %v458, %v456
    %v505 = vpack.c.b16 %v461, %v459
    %v506 = vpack.c.b16 %v462, %v460
    %v507 = vpack.c.b16 %v465, %v463
    %v508 = vpack.c.b16 %v466, %v464
    %v509 = vpack.c.b16 %v469, %v467
    %v510 = vpack.c.b16 %v470, %v468
    %v511 = vpack.c.b16 %v473, %v471
    %v512 = vpack.c.b16 %v474, %v472
    %v513 = vpack.c.b16 %v477, %v475
    %v514 = vpack.c.b16 %v478, %v476
    %v515 = vpack.c.b16 %v481, %v479
    %v516 = vpack.c.b16 %v482, %v480
    %v517 = vpack.c.b16 %v485, %v483
    %v518 = vpack.c.b16 %v486, %v484
    %551 = vmatprep.subr.bf16.mxu0 %v502
    %552 = vmatpush1.bf16.msra.mxu0 %v501
    %553 = vmatprep.subr.bf16.mxu0 %v500
    %554 = vmatpush1.bf16.msra.mxu0 %v499
    %555 = vmatprep.subr.bf16.mxu0 %v498
    %556 = vmatpush1.bf16.msra.mxu0 %v497
    %557 = vmatprep.subr.bf16.mxu0 %v496
    %558 = vmatpush1.bf16.msra.mxu0 %v495
    %559 = vmatprep.subr.bf16.mxu0 %v494
    %560 = vmatpush1.bf16.msra.mxu0 %v493
    %561 = vmatprep.subr.bf16.mxu0 %v492
    %562 = vmatpush1.bf16.msra.mxu0 %v491
    %563 = vmatprep.subr.bf16.mxu0 %v490
    %564 = vmatpush1.bf16.msra.mxu0 %v489
    %565 = vmatprep.subr.bf16.mxu0 %v488
    %566 = vmatpush1.bf16.msra.mxu0 %v487
    %567 = vmatprep.subr.bf16.mxu0 %v518
    %568 = vmatpush2.bf16.msra.mxu0 %v517
    %569 = vmatprep.subr.bf16.mxu0 %v516
    %570 = vmatpush2.bf16.msra.mxu0 %v515
    %571 = vmatprep.subr.bf16.mxu0 %v514
    %572 = vmatpush2.bf16.msra.mxu0 %v513
    %573 = vmatprep.subr.bf16.mxu0 %v512
    %574 = vmatpush2.bf16.msra.mxu0 %v511
    %575 = vmatprep.subr.bf16.mxu0 %v510
    %576 = vmatpush2.bf16.msra.mxu0 %v509
    %577 = vmatprep.subr.bf16.mxu0 %v508
    %578 = vmatpush2.bf16.msra.mxu0 %v507
    %579 = vmatprep.subr.bf16.mxu0 %v506
    %580 = vmatpush2.bf16.msra.mxu0 %v505
    %581 = vmatprep.subr.bf16.mxu0 %v504
    %582 = vmatpush2.bf16.msra.mxu0 %v503
    %583 = vmatprep.mubr.bf16.mxu0 %v346
    %584 = vmatmul.mubr.bf16.gmra.mxu0 %v345
    %v585 = vpop.f32.mrf.mxu0
    %v586 = vadd.f32 %v384, %v585
    %v587 = vpop.f32.mrf.mxu0
    %v588 = vadd.f32 %v388, %v587
    %v589 = vpop.f32.mrf.mxu0
    %v590 = vpop.f32.mrf.mxu0
    %591 = vdwg.mxu0
    %v592 = vmax.f32 %v586, 0.0
    %v593 = vmax.f32 %v588, 0.0
    %v594 = vand.u32 2147483647, %v586
    %v595 = vand.u32 2147483647, %v588
    %v596 = vsub.f32 0.0, %v594
    %v597 = vsub.f32 0.0, %v595
    %v598 = vmul.f32 %v596, 1.442695
    %v599 = vpow.pop %v598
    %v600 = vmul.f32 %v597, 1.442695
    %v601 = vpow.pop %v600
    %v602 = vadd.f32 %v599, 1.0
    %v603 = vlog2.pop %v602
    %v604 = vmul.f32 %v603, 0.6931472
    %v605 = vmul.f32 -0.5, %v599
    %v606 = vadd.f32 %v605, 1.0
    %v607 = vmul.f32 %v606, %v599
    %v608 = vand.u32 2147483647, %v599
    %vm609 = vcmp.lt.f32.partialorder %v608, 0.0004427343
    %v610 = vsel %vm609, %v607, %v604
    %v611 = vadd.f32 %v601, 1.0
    %v612 = vlog2.pop %v611
    %v613 = vmul.f32 %v612, 0.6931472
    %v614 = vmul.f32 -0.5, %v601
    %v615 = vadd.f32 %v614, 1.0
    %v616 = vmul.f32 %v615, %v601
    %v617 = vand.u32 2147483647, %v601
    %vm618 = vcmp.lt.f32.partialorder %v617, 0.0004427343
    %v619 = vsel %vm618, %v616, %v613
    %v620 = vadd.f32 %v592, %v610
    %v621 = vadd.f32 %v593, %v619
    %622 = vst [vmem:[#allocation10] sm:$0xff] %v620
    %623 = vst [vmem:[#allocation10 + $0x8] sm:$0xff] %v621
    // Predicated region
    $region46: #{tpu_custom_call.1} parent=1 // pred_check
      _
    $region47: #{tpu_custom_call.1} parent=1 // pred_check_branch
      %625 = sbr.rel (0) target = $region49
    $region48: #{tpu_custom_call.1} parent=1 // pred_region
      %s627 = ssub.s32 256, 256
      %628 = vsyncadd [#allocation4], %s627
      %s630 = sshll.u32 [#allocation10], 4
      %s631 = int_to_ptr.vmem [resolvable:$true] %s630
      %633 = dma.vmem_to_hbm [thread:$0]  %s631, 256, %s7, [#allocation4]
    $region49: #{tpu_custom_call.1} parent=1 // pred_fallthru
      _
    // Predicated region
    $region50: #{tpu_custom_call.1} parent=1 // pred_check
      _
    $region51: #{tpu_custom_call.1} parent=1 // pred_check_branch
      %635 = sbr.rel (0) target = $region53
    $region52: #{tpu_custom_call.1} parent=1 // pred_region
      %636 = dma.done [#allocation4], 256
    $region53: #{tpu_custom_call.1} parent=1 // pred_fallthru
      _
    %637 = vsyncpa [#allocation3], 1
    %638 = vsyncpa [#allocation6], 1
    %639 = vsyncpa [#allocation9], 1
    %640 = vsyncpa [#allocation4], 1

</llo_original>
